<compile_context>
chip_gen: v7x
topology: tpu7x:2x2x1
jax: 0.10.0
libtpu: 0.0.40
codegen_flags: <defaults>
</compile_context>

<pallas_src>
import functools

import jax
import jax.numpy as jnp
from jax.experimental import pallas as pl
from jax.experimental.pallas import tpu as pltpu


def _round_up(n, m):
    return pl.cdiv(n, m) * m


def policy_mlp_kernel(x_ref, w1_ref, b1_ref, w2_ref, b2_ref,
                      w3_ref, b3_ref, scale_ref, bias_ref, out_ref):
    # Activations are cast to bf16 to match the bf16 weights; all matmuls
    # accumulate in f32 on the MXU.
    x = x_ref[...].astype(jnp.bfloat16)

    # fc1 + ReLU
    h1 = jnp.dot(x, w1_ref[...], preferred_element_type=jnp.float32) + b1_ref[...]
    h1 = jnp.maximum(h1, 0.0).astype(jnp.bfloat16)

    # fc2 + ReLU
    h2 = jnp.dot(h1, w2_ref[...], preferred_element_type=jnp.float32) + b2_ref[...]
    h2 = jnp.maximum(h2, 0.0).astype(jnp.bfloat16)

    # fc_mu + tanh (EUP), then affine rescale to the action range (VPU)
    mu = jnp.tanh(
        jnp.dot(h2, w3_ref[...], preferred_element_type=jnp.float32) + b3_ref[...]
    )

    out_ref[...] = (mu * scale_ref[...] + bias_ref[...]).astype(out_ref.dtype)


@functools.partial(jax.jit, static_argnames=("batch_tile",))
def policy_mlp_forward(x, params, *, batch_tile=1024):
    """x: (B, obs_dim) float32. params: dict of bf16 weights + f32 biases/buffers."""
    B, obs_dim = x.shape
    act_dim = params["w3"].shape[1]

    # ---- batch tiling (all Python ints at trace time) ----
    b8 = _round_up(B, 8)
    tb = min(batch_tile, b8)
    # v7x megacore: if the batch is big enough to justify a second grid step
    # (>~0.35us of extra overhead) but would otherwise be a single tile, split
    # it so the 'parallel' axis can shard across both TensorCores.
    if 256 < b8 <= batch_tile:
        tb = min(batch_tile, _round_up(pl.cdiv(b8, 2), 8))
    b_p = _round_up(B, tb)
    n_tiles = b_p // tb

    xp = x if b_p == B else jnp.pad(x, ((0, b_p - B), (0, 0)))

    # Weights/biases/buffers: full-array block whose index_map always returns
    # block (0, 0) -> fetched once, VMEM-resident across all grid steps.
    resident = lambda a: pl.BlockSpec(a.shape, lambda i: (0, 0))

    args = (xp, params["w1"], params["b1"], params["w2"], params["b2"],
            params["w3"], params["b3"],
            params["action_scale"], params["action_bias"])

    out = pl.pallas_call(
        policy_mlp_kernel,
        out_shape=jax.ShapeDtypeStruct((b_p, act_dim), jnp.float32),
        grid=(n_tiles,),
        in_specs=[
            pl.BlockSpec((tb, obs_dim), lambda i: (i, 0)),   # x: streamed batch tiles
            resident(params["w1"]), resident(params["b1"]),
            resident(params["w2"]), resident(params["b2"]),
            resident(params["w3"]), resident(params["b3"]),
            resident(params["action_scale"]), resident(params["action_bias"]),
        ],
        # Block last dim == full array last dim (act_dim), so no 128-lane
        # padding is required; output HBM writeback is only the real columns.
        out_specs=pl.BlockSpec((tb, act_dim), lambda i: (i, 0)),
        compiler_params=pltpu.CompilerParams(
            dimension_semantics=("parallel",),        # shard batch across v7x's 2 TCs
            vmem_limit_bytes=32 * 1024 * 1024,        # safe on v5e/v6e/v7x, covers tb<=2048
        ),
    )(*args)

    return out if b_p == B else out[:B]


def init_params(key, obs_dim, node_count, act_dim, action_low, action_high):
    """torch.nn.Linear-style init (U[-1/sqrt(fan_in), 1/sqrt(fan_in)]).

    Weights are stored in bf16 (kernel compute dtype); biases and action
    scale/bias buffers stay f32.  All shapes are already kernel-ready — no
    per-call padding or reshaping happens inside the jitted forward.
    """
    ks = jax.random.split(key, 6)

    def linear(kw, kb, fan_in, fan_out):
        bound = 1.0 / jnp.sqrt(jnp.float32(fan_in))
        w = jax.random.uniform(kw, (fan_in, fan_out), jnp.float32, -bound, bound)
        b = jax.random.uniform(kb, (1, fan_out), jnp.float32, -bound, bound)
        return w.astype(jnp.bfloat16), b

    w1, b1 = linear(ks[0], ks[1], obs_dim, node_count)
    w2, b2 = linear(ks[2], ks[3], node_count, node_count)
    w3, b3 = linear(ks[4], ks[5], node_count, act_dim)

    action_scale = ((action_high - action_low) / 2.0).reshape(1, act_dim).astype(jnp.float32)
    action_bias = ((action_high + action_low) / 2.0).reshape(1, act_dim).astype(jnp.float32)

    return {"w1": w1, "b1": b1, "w2": w2, "b2": b2, "w3": w3, "b3": b3,
            "action_scale": action_scale, "action_bias": action_bias}


def reference_forward(x, p):
    """Pure-JAX reference mirroring the kernel's bf16-weight / f32-accumulate path."""
    def dense(a, w, b):
        return jnp.dot(a.astype(jnp.bfloat16), w,
                       preferred_element_type=jnp.float32) + b

    h1 = jnp.maximum(dense(x, p["w1"], p["b1"]), 0.0)
    h2 = jnp.maximum(dense(h1, p["w2"], p["b2"]), 0.0)
    mu = jnp.tanh(dense(h2, p["w3"], p["b3"]))
    return mu * p["action_scale"] + p["action_bias"]


if __name__ == "__main__":
    key = jax.random.PRNGKey(0)
    k_x, k_p, k_x2 = jax.random.split(key, 3)

    batch = 2
    obs_dim = 8        # env.observation_space.shape[0]
    node_count = 256   # fixed in the module
    act_dim = 4        # env.action_space.shape[0]

    action_low = jnp.full((act_dim,), -2.0, dtype=jnp.float32)
    action_high = jnp.full((act_dim,), 2.0, dtype=jnp.float32)

    params = init_params(k_p, obs_dim, node_count, act_dim, action_low, action_high)

    # Small RL-inference batch (single grid step).
    x = jax.random.normal(k_x, (batch, obs_dim), dtype=jnp.float32)
    out = jax.block_until_ready(policy_mlp_forward(x, params))
    ref = reference_forward(x, params)
    assert out.shape == (batch, act_dim), out.shape
    assert jnp.allclose(out, ref, atol=2e-3, rtol=2e-3), "mismatch vs. JAX reference"
    assert bool(jnp.all(jnp.abs(out) <= 2.0 + 1e-4))

    # Larger batch exercising the multi-tile / megacore-split path.
    big_batch = 600
    x2 = jax.random.normal(k_x2, (big_batch, obs_dim), dtype=jnp.float32)
    out2 = jax.block_until_ready(policy_mlp_forward(x2, params))
    ref2 = reference_forward(x2, params)
    assert out2.shape == (big_batch, act_dim), out2.shape
    assert jnp.allclose(out2, ref2, atol=2e-3, rtol=2e-3), "mismatch vs. JAX reference (big batch)"

    print("KERNEL_OK")
</pallas_src>

<mosaic_0001>
module attributes {stable_mosaic.version = 11 : i64} {
  func.func @policy_mlp_kernel(%arg0: i32, %arg1: memref<8x8xf32, #tpu.memory_space<vmem>>, %arg2: memref<8x256xbf16, #tpu.memory_space<vmem>>, %arg3: memref<1x256xf32, #tpu.memory_space<vmem>>, %arg4: memref<256x256xbf16, #tpu.memory_space<vmem>>, %arg5: memref<1x256xf32, #tpu.memory_space<vmem>>, %arg6: memref<256x4xbf16, #tpu.memory_space<vmem>>, %arg7: memref<1x4xf32, #tpu.memory_space<vmem>>, %arg8: memref<1x4xf32, #tpu.memory_space<vmem>>, %arg9: memref<1x4xf32, #tpu.memory_space<vmem>>, %arg10: memref<8x4xf32, #tpu.memory_space<vmem>>) attributes {dimension_semantics = [#tpu.dimension_semantics<parallel>], iteration_bounds = array<i64: 1>, scalar_prefetch = 0 : i64, scratch_operands = 0 : i64, tpu.core_type = #tpu.core_type<tc>, window_params = [{transform_indices = @transform_0, window_bounds = array<i64: 8, 8>}, {pipeline_mode = #tpu.pipeline_mode<synchronous>, transform_indices = @transform_1, window_bounds = array<i64: 8, 256>}, {pipeline_mode = #tpu.pipeline_mode<synchronous>, transform_indices = @transform_2, window_bounds = array<i64: 1, 256>}, {pipeline_mode = #tpu.pipeline_mode<synchronous>, transform_indices = @transform_3, window_bounds = array<i64: 256, 256>}, {pipeline_mode = #tpu.pipeline_mode<synchronous>, transform_indices = @transform_4, window_bounds = array<i64: 1, 256>}, {pipeline_mode = #tpu.pipeline_mode<synchronous>, transform_indices = @transform_5, window_bounds = array<i64: 256, 4>}, {pipeline_mode = #tpu.pipeline_mode<synchronous>, transform_indices = @transform_6, window_bounds = array<i64: 1, 4>}, {pipeline_mode = #tpu.pipeline_mode<synchronous>, transform_indices = @transform_7, window_bounds = array<i64: 1, 4>}, {pipeline_mode = #tpu.pipeline_mode<synchronous>, transform_indices = @transform_8, window_bounds = array<i64: 1, 4>}, {transform_indices = @transform_9, window_bounds = array<i64: 8, 4>}]} {
    %c0 = arith.constant 0 : index
    %c0_0 = arith.constant 0 : index
    %0 = vector.load %arg1[%c0, %c0_0] : memref<8x8xf32, #tpu.memory_space<vmem>>, vector<8x8xf32>
    %1 = arith.truncf %0 : vector<8x8xf32> to vector<8x8xbf16>
    %c0_1 = arith.constant 0 : index
    %c0_2 = arith.constant 0 : index
    %2 = vector.load %arg2[%c0_1, %c0_2] : memref<8x256xbf16, #tpu.memory_space<vmem>>, vector<8x256xbf16>
    %cst = arith.constant dense<0.000000e+00> : vector<8x256xf32>
    %3 = tpu.matmul %1, %2, %cst {dimension_numbers = #tpu.dot_dimension_numbers<[1], [0], [0], [1], [0, 0, 1, 1], [], []>} : vector<8x8xbf16>, vector<8x256xbf16>, vector<8x256xf32> -> vector<8x256xf32>
    %c0_3 = arith.constant 0 : index
    %c0_4 = arith.constant 0 : index
    %4 = vector.load %arg3[%c0_3, %c0_4] : memref<1x256xf32, #tpu.memory_space<vmem>>, vector<1x256xf32>
    %5 = vector.broadcast %4 : vector<1x256xf32> to vector<8x256xf32>
    %6 = arith.addf %3, %5 : vector<8x256xf32>
    %cst_5 = arith.constant 0.000000e+00 : f32
    %7 = vector.broadcast %cst_5 : f32 to vector<8x256xf32>
    %8 = arith.maximumf %6, %7 : vector<8x256xf32>
    %9 = arith.truncf %8 : vector<8x256xf32> to vector<8x256xbf16>
    %c0_6 = arith.constant 0 : index
    %c0_7 = arith.constant 0 : index
    %10 = vector.load %arg4[%c0_6, %c0_7] : memref<256x256xbf16, #tpu.memory_space<vmem>>, vector<256x256xbf16>
    %cst_8 = arith.constant dense<0.000000e+00> : vector<8x256xf32>
    %11 = tpu.matmul %9, %10, %cst_8 {dimension_numbers = #tpu.dot_dimension_numbers<[1], [0], [0], [1], [0, 0, 1, 1], [], []>} : vector<8x256xbf16>, vector<256x256xbf16>, vector<8x256xf32> -> vector<8x256xf32>
    %c0_9 = arith.constant 0 : index
    %c0_10 = arith.constant 0 : index
    %12 = vector.load %arg5[%c0_9, %c0_10] : memref<1x256xf32, #tpu.memory_space<vmem>>, vector<1x256xf32>
    %13 = vector.broadcast %12 : vector<1x256xf32> to vector<8x256xf32>
    %14 = arith.addf %11, %13 : vector<8x256xf32>
    %cst_11 = arith.constant 0.000000e+00 : f32
    %15 = vector.broadcast %cst_11 : f32 to vector<8x256xf32>
    %16 = arith.maximumf %14, %15 : vector<8x256xf32>
    %17 = arith.truncf %16 : vector<8x256xf32> to vector<8x256xbf16>
    %c0_12 = arith.constant 0 : index
    %c0_13 = arith.constant 0 : index
    %18 = vector.load %arg6[%c0_12, %c0_13] : memref<256x4xbf16, #tpu.memory_space<vmem>>, vector<256x4xbf16>
    %cst_14 = arith.constant dense<0.000000e+00> : vector<8x4xf32>
    %19 = tpu.matmul %17, %18, %cst_14 {dimension_numbers = #tpu.dot_dimension_numbers<[1], [0], [0], [1], [0, 0, 1, 1], [], []>} : vector<8x256xbf16>, vector<256x4xbf16>, vector<8x4xf32> -> vector<8x4xf32>
    %c0_15 = arith.constant 0 : index
    %c0_16 = arith.constant 0 : index
    %20 = vector.load %arg7[%c0_15, %c0_16] : memref<1x4xf32, #tpu.memory_space<vmem>>, vector<1x4xf32>
    %21 = vector.broadcast %20 : vector<1x4xf32> to vector<8x4xf32>
    %22 = arith.addf %19, %21 : vector<8x4xf32>
    %23 = math.tanh %22 : vector<8x4xf32>
    %c0_17 = arith.constant 0 : index
    %c0_18 = arith.constant 0 : index
    %24 = vector.load %arg8[%c0_17, %c0_18] : memref<1x4xf32, #tpu.memory_space<vmem>>, vector<1x4xf32>
    %25 = vector.broadcast %24 : vector<1x4xf32> to vector<8x4xf32>
    %26 = arith.mulf %23, %25 : vector<8x4xf32>
    %c0_19 = arith.constant 0 : index
    %c0_20 = arith.constant 0 : index
    %27 = vector.load %arg9[%c0_19, %c0_20] : memref<1x4xf32, #tpu.memory_space<vmem>>, vector<1x4xf32>
    %28 = vector.broadcast %27 : vector<1x4xf32> to vector<8x4xf32>
    %29 = arith.addf %26, %28 : vector<8x4xf32>
    %c0_21 = arith.constant 0 : index
    %c0_22 = arith.constant 0 : index
    %30 = vector.load %arg10[%c0_21, %c0_22] : memref<8x4xf32, #tpu.memory_space<vmem>>, vector<8x4xf32>
    tpu.vector_store %arg10[%c0_21, %c0_22], %29 {strides = array<i32>} : memref<8x4xf32, #tpu.memory_space<vmem>>, vector<8x4xf32>,
    return
  }
  func.func @transform_0(%arg0: i32) -> (i32, i32) {
    %c0_i32 = arith.constant 0 : i32
    %c0_i32_0 = arith.constant 0 : i32
    return %arg0, %c0_i32 : i32, i32
  }
  func.func @transform_1(%arg0: i32) -> (i32, i32) {
    %c0_i32 = arith.constant 0 : i32
    %c0_i32_0 = arith.constant 0 : i32
    %c0_i32_1 = arith.constant 0 : i32
    return %c0_i32, %c0_i32_0 : i32, i32
  }
  func.func @transform_2(%arg0: i32) -> (i32, i32) {
    %c0_i32 = arith.constant 0 : i32
    %c0_i32_0 = arith.constant 0 : i32
    %c0_i32_1 = arith.constant 0 : i32
    return %c0_i32, %c0_i32_0 : i32, i32
  }
  func.func @transform_3(%arg0: i32) -> (i32, i32) {
    %c0_i32 = arith.constant 0 : i32
    %c0_i32_0 = arith.constant 0 : i32
    %c0_i32_1 = arith.constant 0 : i32
    return %c0_i32, %c0_i32_0 : i32, i32
  }
  func.func @transform_4(%arg0: i32) -> (i32, i32) {
    %c0_i32 = arith.constant 0 : i32
    %c0_i32_0 = arith.constant 0 : i32
    %c0_i32_1 = arith.constant 0 : i32
    return %c0_i32, %c0_i32_0 : i32, i32
  }
  func.func @transform_5(%arg0: i32) -> (i32, i32) {
    %c0_i32 = arith.constant 0 : i32
    %c0_i32_0 = arith.constant 0 : i32
    %c0_i32_1 = arith.constant 0 : i32
    return %c0_i32, %c0_i32_0 : i32, i32
  }
  func.func @transform_6(%arg0: i32) -> (i32, i32) {
    %c0_i32 = arith.constant 0 : i32
    %c0_i32_0 = arith.constant 0 : i32
    %c0_i32_1 = arith.constant 0 : i32
    return %c0_i32, %c0_i32_0 : i32, i32
  }
  func.func @transform_7(%arg0: i32) -> (i32, i32) {
    %c0_i32 = arith.constant 0 : i32
    %c0_i32_0 = arith.constant 0 : i32
    %c0_i32_1 = arith.constant 0 : i32
    return %c0_i32, %c0_i32_0 : i32, i32
  }
  func.func @transform_8(%arg0: i32) -> (i32, i32) {
    %c0_i32 = arith.constant 0 : i32
    %c0_i32_0 = arith.constant 0 : i32
    %c0_i32_1 = arith.constant 0 : i32
    return %c0_i32, %c0_i32_0 : i32, i32
  }
  func.func @transform_9(%arg0: i32) -> (i32, i32) {
    %c0_i32 = arith.constant 0 : i32
    %c0_i32_0 = arith.constant 0 : i32
    return %arg0, %c0_i32 : i32, i32
  }
}

</mosaic_0001>

<llo_original>
// kernel: policy_mlp_forward.1
$region0: #{policy_mlp_forward.1}
  #allocation0 [shape = 'u32[]', space=smem, size = 0x4, offset = 0x4, fixed_abs, tag = 'smem constant byte address 0x4 - core index']
  #allocation1 [shape = 'u32[144,128]{1,0:T(1,128)}', space=vmem, size = 0x12000, scoped, tag = 'internal scratch']
  %s0 = inlined_call_operand.vmem [shape: f32[8,8], index: 0, kind: input, shape index: {}]
  %s1 = inlined_call_operand.vmem [shape: bf16[8,256], index: 1, kind: input, shape index: {}]
  %s2 = inlined_call_operand.vmem [shape: f32[1,256], index: 2, kind: input, shape index: {}]
  %s3 = inlined_call_operand.hbm [shape: bf16[256,256], index: 3, kind: input, shape index: {}]
  %s4 = inlined_call_operand.vmem [shape: f32[1,256], index: 4, kind: input, shape index: {}]
  %s5 = inlined_call_operand.vmem [shape: bf16[256,4], index: 5, kind: input, shape index: {}]
  %s6 = inlined_call_operand.vmem [shape: f32[1,4], index: 6, kind: input, shape index: {}]
  %s7 = inlined_call_operand.vmem [shape: f32[1,4], index: 7, kind: input, shape index: {}]
  %s8 = inlined_call_operand.vmem [shape: f32[1,4], index: 8, kind: input, shape index: {}]
  %s9 = inlined_call_operand.vmem [shape: f32[8,4], index: 9, kind: output, shape index: {}]
  %s10 = sld [smem:[#allocation0]]
  $region50: #{policy_mlp_forward.1} parent=0
    _
  %s12 = ssub.s32 1, %s10
  %s13 = scalar_select 0, %s12, %s10
  $region1: #{policy_mlp_forward.1} parent=0
    #allocation2 [shape = 'u8[131072]{0}', space=vmem, size = 0x20000, scoped, tag = 'input window, operand 3, single buffered']
    #allocation3 [shape = 's32[1]{0}', space=sflag, size = 0x4, scoped, tag = 'scoped memory for policy_mlp_forward.1']
    %14 = vsyncpa [#allocation3], 0
    // Predicated region
    $region2: #{policy_mlp_forward.1} parent=1 // pred_check
      _
    $region3: #{policy_mlp_forward.1} parent=1 // pred_check_branch
      %16 = sbr.rel (0) target = $region5
    $region4: #{policy_mlp_forward.1} parent=1 // pred_region
      _
    $region5: #{policy_mlp_forward.1} parent=1 // pred_fallthru
      _
    // Predicated region
    $region6: #{policy_mlp_forward.1} parent=1 // pred_check
      _
    $region7: #{policy_mlp_forward.1} parent=1 // pred_check_branch
      %18 = sbr.rel (0) target = $region9
    $region8: #{policy_mlp_forward.1} parent=1 // pred_region
      _
    $region9: #{policy_mlp_forward.1} parent=1 // pred_fallthru
      _
    // Predicated region
    $region10: #{policy_mlp_forward.1} parent=1 // pred_check
      _
    $region11: #{policy_mlp_forward.1} parent=1 // pred_check_branch
      %20 = sbr.rel (0) target = $region13
    $region12: #{policy_mlp_forward.1} parent=1 // pred_region
      _
    $region13: #{policy_mlp_forward.1} parent=1 // pred_fallthru
      _
    // Predicated region
    $region14: #{policy_mlp_forward.1} parent=1 // pred_check
      _
    $region15: #{policy_mlp_forward.1} parent=1 // pred_check_branch
      %22 = sbr.rel (0) target = $region17
    $region16: #{policy_mlp_forward.1} parent=1 // pred_region
      %s24 = ssub.s32 4096, 4096
      %25 = vsyncadd [#allocation3], %s24
      %s26 = sshll.u32 [#allocation2], 4
      %s27 = int_to_ptr.vmem [resolvable:$true] %s26
      %32 = dma.hbm_to_vmem [thread:$0]  %s3, 4096, %s27, [#allocation3], 128, 128, 8
    $region17: #{policy_mlp_forward.1} parent=1 // pred_fallthru
      _
    // Predicated region
    $region18: #{policy_mlp_forward.1} parent=1 // pred_check
      _
    $region19: #{policy_mlp_forward.1} parent=1 // pred_check_branch
      %34 = sbr.rel (0) target = $region21
    $region20: #{policy_mlp_forward.1} parent=1 // pred_region
      _
    $region21: #{policy_mlp_forward.1} parent=1 // pred_fallthru
      _
    // Predicated region
    $region22: #{policy_mlp_forward.1} parent=1 // pred_check
      _
    $region23: #{policy_mlp_forward.1} parent=1 // pred_check_branch
      %36 = sbr.rel (0) target = $region25
    $region24: #{policy_mlp_forward.1} parent=1 // pred_region
      _
    $region25: #{policy_mlp_forward.1} parent=1 // pred_fallthru
      _
    // Predicated region
    $region26: #{policy_mlp_forward.1} parent=1 // pred_check
      _
    $region27: #{policy_mlp_forward.1} parent=1 // pred_check_branch
      %38 = sbr.rel (0) target = $region29
    $region28: #{policy_mlp_forward.1} parent=1 // pred_region
      _
    $region29: #{policy_mlp_forward.1} parent=1 // pred_fallthru
      _
    // Predicated region
    $region30: #{policy_mlp_forward.1} parent=1 // pred_check
      _
    $region31: #{policy_mlp_forward.1} parent=1 // pred_check_branch
      %40 = sbr.rel (0) target = $region33
    $region32: #{policy_mlp_forward.1} parent=1 // pred_region
      _
    $region33: #{policy_mlp_forward.1} parent=1 // pred_fallthru
      _
    // Predicated region
    $region34: #{policy_mlp_forward.1} parent=1 // pred_check
      _
    $region35: #{policy_mlp_forward.1} parent=1 // pred_check_branch
      %42 = sbr.rel (0) target = $region37
    $region36: #{policy_mlp_forward.1} parent=1 // pred_region
      _
    $region37: #{policy_mlp_forward.1} parent=1 // pred_fallthru
      _
    // Predicated region
    $region38: #{policy_mlp_forward.1} parent=1 // pred_check
      _
    $region39: #{policy_mlp_forward.1} parent=1 // pred_check_branch
      %44 = sbr.rel (0) target = $region41
    $region40: #{policy_mlp_forward.1} parent=1 // pred_region
      %45 = dma.done [#allocation3], 4096
    $region41: #{policy_mlp_forward.1} parent=1 // pred_fallthru
      _
    %v47 = vld [vmem:[%s0] sm:$0xff]
    %v48 = vpack.c.bf16 %v47, %v47
    %v49 = vld [vmem:[%s1] sm:$0xff]
    %v50 = vld [vmem:[%s2] sm:$0x3]
    %v52 = vlaneseq
    %v53 = vshrl.u32 %v52, 7
    %v54 = vsub.s32 0, %v53
    %v55 = vrot.slane %v50, %v54
    %v56 = vlaneseq
    %v57 = vshrl.u32 %v56, 7
    %v58 = vsub.s32 1, %v57
    %v59 = vrot.slane %v50, %v58
    %v63 = vunpack.c.l.b16 %v49
    %v64 = vunpack.c.h.b16 %v49
    %v65 = vpack.c.b16 %v63, %v63
    %v66 = vpack.c.b16 %v64, %v64
    %vm67 = vcmask 64512
    %v69 = vsel %vm67, %v48, 0
    %vm71 = vcmask 1043456
    %v73 = vsel %vm71, %v65, 0
    %v76 = vsel %vm71, %v66, 0
    %78 = vmatprep.subr.bf16.mxu0 %v76
    %79 = vmatpush1.bf16.msra.mxu0 %v73
    %80 = vmatprep.subr.bf16.mxu0 0
    %81 = vmatpush1.bf16.msra.mxu0 0
    %82 = vmatprep.subr.bf16.mxu0 0
    %83 = vmatpush1.bf16.msra.mxu0 0
    %84 = vmatprep.subr.bf16.mxu0 0
    %85 = vmatpush1.bf16.msra.mxu0 0
    %86 = vmatprep.subr.bf16.mxu0 0
    %87 = vmatpush1.bf16.msra.mxu0 0
    %88 = vmatprep.subr.bf16.mxu0 0
    %89 = vmatpush1.bf16.msra.mxu0 0
    %90 = vmatprep.subr.bf16.mxu0 0
    %91 = vmatpush1.bf16.msra.mxu0 0
    %92 = vmatprep.subr.bf16.mxu0 0
    %93 = vmatpush1.bf16.msra.mxu0 0
    %94 = vmatprep.subr.bf16.mxu0 0
    %95 = vmatpush1.bf16.msra.mxu0 0
    %96 = vmatprep.subr.bf16.mxu0 0
    %97 = vmatpush1.bf16.msra.mxu0 0
    %98 = vmatprep.subr.bf16.mxu0 0
    %99 = vmatpush1.bf16.msra.mxu0 0
    %100 = vmatprep.subr.bf16.mxu0 0
    %101 = vmatpush1.bf16.msra.mxu0 0
    %102 = vmatprep.subr.bf16.mxu0 0
    %103 = vmatpush1.bf16.msra.mxu0 0
    %104 = vmatprep.subr.bf16.mxu0 0
    %105 = vmatpush1.bf16.msra.mxu0 0
    %106 = vmatprep.subr.bf16.mxu0 0
    %107 = vmatpush1.bf16.msra.mxu0 0
    %108 = vmatprep.subr.bf16.mxu0 0
    %109 = vmatpush1.bf16.msra.mxu0 0
    %110 = vmatprep.mubr.bf16.mxu0 0
    %111 = vmatmul.mubr.bf16.gmra.mrb[0].mxu0 %v69
    %v112 = vpop.f32.mrb[0].mxu0
    %v113 = vadd.f32 %v55, %v112
    %v114 = vpop.f32.mrb[0].mxu0
    %v115 = vadd.f32 %v59, %v114
    %v116 = vpop.f32.mrb[0].mxu0
    %v117 = vpop.f32.mrb[0].mxu0
    %118 = vdwg.mxu0
    %v119 = vmax.f32 %v113, 0.0
    %v120 = vmax.f32 %v115, 0.0
    %v121 = vpack.c.bf16 %v119, %v119
    %v122 = vpack.c.bf16 %v120, %v120
    %v123 = vld [vmem:[#allocation2] sm:$0xff]
    %v124 = vld [vmem:[#allocation2 + $0x8] sm:$0xff]
    %v125 = vld [vmem:[#allocation2 + $0x10] sm:$0xff]
    %v126 = vld [vmem:[#allocation2 + $0x18] sm:$0xff]
    %v127 = vld [vmem:[#allocation2 + $0x20] sm:$0xff]
    %v128 = vld [vmem:[#allocation2 + $0x28] sm:$0xff]
    %v129 = vld [vmem:[#allocation2 + $0x30] sm:$0xff]
    %v130 = vld [vmem:[#allocation2 + $0x38] sm:$0xff]
    %v131 = vld [vmem:[#allocation2 + $0x40] sm:$0xff]
    %v132 = vld [vmem:[#allocation2 + $0x48] sm:$0xff]
    %v133 = vld [vmem:[#allocation2 + $0x50] sm:$0xff]
    %v134 = vld [vmem:[#allocation2 + $0x58] sm:$0xff]
    %v135 = vld [vmem:[#allocation2 + $0x60] sm:$0xff]
    %v136 = vld [vmem:[#allocation2 + $0x68] sm:$0xff]
    %v137 = vld [vmem:[#allocation2 + $0x70] sm:$0xff]
    %v138 = vld [vmem:[#allocation2 + $0x78] sm:$0xff]
    %v139 = vld [vmem:[#allocation2 + $0x80] sm:$0xff]
    %v140 = vld [vmem:[#allocation2 + $0x88] sm:$0xff]
    %v141 = vld [vmem:[#allocation2 + $0x90] sm:$0xff]
    %v142 = vld [vmem:[#allocation2 + $0x98] sm:$0xff]
    %v143 = vld [vmem:[#allocation2 + $0xa0] sm:$0xff]
    %v144 = vld [vmem:[#allocation2 + $0xa8] sm:$0xff]
    %v145 = vld [vmem:[#allocation2 + $0xb0] sm:$0xff]
    %v146 = vld [vmem:[#allocation2 + $0xb8] sm:$0xff]
    %v147 = vld [vmem:[#allocation2 + $0xc0] sm:$0xff]
    %v148 = vld [vmem:[#allocation2 + $0xc8] sm:$0xff]
    %v149 = vld [vmem:[#allocation2 + $0xd0] sm:$0xff]
    %v150 = vld [vmem:[#allocation2 + $0xd8] sm:$0xff]
    %v151 = vld [vmem:[#allocation2 + $0xe0] sm:$0xff]
    %v152 = vld [vmem:[#allocation2 + $0xe8] sm:$0xff]
    %v153 = vld [vmem:[#allocation2 + $0xf0] sm:$0xff]
    %v154 = vld [vmem:[#allocation2 + $0xf8] sm:$0xff]
    %v155 = vld [vmem:[%s4] sm:$0x3]
    %v157 = vlaneseq
    %v158 = vshrl.u32 %v157, 7
    %v159 = vsub.s32 0, %v158
    %v160 = vrot.slane %v155, %v159
    %v161 = vlaneseq
    %v162 = vshrl.u32 %v161, 7
    %v163 = vsub.s32 1, %v162
    %v164 = vrot.slane %v155, %v163
    %v199 = vunpack.c.l.b16 %v123
    %v200 = vunpack.c.h.b16 %v123
    %v201 = vunpack.c.l.b16 %v124
    %v202 = vunpack.c.h.b16 %v124
    %v203 = vunpack.c.l.b16 %v125
    %v204 = vunpack.c.h.b16 %v125
    %v205 = vunpack.c.l.b16 %v126
    %v206 = vunpack.c.h.b16 %v126
    %v207 = vunpack.c.l.b16 %v127
    %v208 = vunpack.c.h.b16 %v127
    %v209 = vunpack.c.l.b16 %v128
    %v210 = vunpack.c.h.b16 %v128
    %v211 = vunpack.c.l.b16 %v129
    %v212 = vunpack.c.h.b16 %v129
    %v213 = vunpack.c.l.b16 %v130
    %v214 = vunpack.c.h.b16 %v130
    %v215 = vunpack.c.l.b16 %v131
    %v216 = vunpack.c.h.b16 %v131
    %v217 = vunpack.c.l.b16 %v132
    %v218 = vunpack.c.h.b16 %v132
    %v219 = vunpack.c.l.b16 %v133
    %v220 = vunpack.c.h.b16 %v133
    %v221 = vunpack.c.l.b16 %v134
    %v222 = vunpack.c.h.b16 %v134
    %v223 = vunpack.c.l.b16 %v135
    %v224 = vunpack.c.h.b16 %v135
    %v225 = vunpack.c.l.b16 %v136
    %v226 = vunpack.c.h.b16 %v136
    %v227 = vunpack.c.l.b16 %v137
    %v228 = vunpack.c.h.b16 %v137
    %v229 = vunpack.c.l.b16 %v138
    %v230 = vunpack.c.h.b16 %v138
    %v231 = vunpack.c.l.b16 %v139
    %v232 = vunpack.c.h.b16 %v139
    %v233 = vunpack.c.l.b16 %v140
    %v234 = vunpack.c.h.b16 %v140
    %v235 = vunpack.c.l.b16 %v141
    %v236 = vunpack.c.h.b16 %v141
    %v237 = vunpack.c.l.b16 %v142
    %v238 = vunpack.c.h.b16 %v142
    %v239 = vunpack.c.l.b16 %v143
    %v240 = vunpack.c.h.b16 %v143
    %v241 = vunpack.c.l.b16 %v144
    %v242 = vunpack.c.h.b16 %v144
    %v243 = vunpack.c.l.b16 %v145
    %v244 = vunpack.c.h.b16 %v145
    %v245 = vunpack.c.l.b16 %v146
    %v246 = vunpack.c.h.b16 %v146
    %v247 = vunpack.c.l.b16 %v147
    %v248 = vunpack.c.h.b16 %v147
    %v249 = vunpack.c.l.b16 %v148
    %v250 = vunpack.c.h.b16 %v148
    %v251 = vunpack.c.l.b16 %v149
    %v252 = vunpack.c.h.b16 %v149
    %v253 = vunpack.c.l.b16 %v150
    %v254 = vunpack.c.h.b16 %v150
    %v255 = vunpack.c.l.b16 %v151
    %v256 = vunpack.c.h.b16 %v151
    %v257 = vunpack.c.l.b16 %v152
    %v258 = vunpack.c.h.b16 %v152
    %v259 = vunpack.c.l.b16 %v153
    %v260 = vunpack.c.h.b16 %v153
    %v261 = vunpack.c.l.b16 %v154
    %v262 = vunpack.c.h.b16 %v154
    %v263 = vpack.c.b16 %v201, %v199
    %v264 = vpack.c.b16 %v202, %v200
    %v265 = vpack.c.b16 %v205, %v203
    %v266 = vpack.c.b16 %v206, %v204
    %v267 = vpack.c.b16 %v209, %v207
    %v268 = vpack.c.b16 %v210, %v208
    %v269 = vpack.c.b16 %v213, %v211
    %v270 = vpack.c.b16 %v214, %v212
    %v271 = vpack.c.b16 %v217, %v215
    %v272 = vpack.c.b16 %v218, %v216
    %v273 = vpack.c.b16 %v221, %v219
    %v274 = vpack.c.b16 %v222, %v220
    %v275 = vpack.c.b16 %v225, %v223
    %v276 = vpack.c.b16 %v226, %v224
    %v277 = vpack.c.b16 %v229, %v227
    %v278 = vpack.c.b16 %v230, %v228
    %v279 = vpack.c.b16 %v233, %v231
    %v280 = vpack.c.b16 %v234, %v232
    %v281 = vpack.c.b16 %v237, %v235
    %v282 = vpack.c.b16 %v238, %v236
    %v283 = vpack.c.b16 %v241, %v239
    %v284 = vpack.c.b16 %v242, %v240
    %v285 = vpack.c.b16 %v245, %v243
    %v286 = vpack.c.b16 %v246, %v244
    %v287 = vpack.c.b16 %v249, %v247
    %v288 = vpack.c.b16 %v250, %v248
    %v289 = vpack.c.b16 %v253, %v251
    %v290 = vpack.c.b16 %v254, %v252
    %v291 = vpack.c.b16 %v257, %v255
    %v292 = vpack.c.b16 %v258, %v256
    %v293 = vpack.c.b16 %v261, %v259
    %v294 = vpack.c.b16 %v262, %v260
    %327 = vmatprep.subr.bf16.mxu0 %v264
    %328 = vmatpush1.bf16.msra.mxu0 %v263
    %329 = vmatprep.subr.bf16.mxu0 %v266
    %330 = vmatpush1.bf16.msra.mxu0 %v265
    %331 = vmatprep.subr.bf16.mxu0 %v268
    %332 = vmatpush1.bf16.msra.mxu0 %v267
    %333 = vmatprep.subr.bf16.mxu0 %v270
    %334 = vmatpush1.bf16.msra.mxu0 %v269
    %335 = vmatprep.subr.bf16.mxu0 %v272
    %336 = vmatpush1.bf16.msra.mxu0 %v271
    %337 = vmatprep.subr.bf16.mxu0 %v274
    %338 = vmatpush1.bf16.msra.mxu0 %v273
    %339 = vmatprep.subr.bf16.mxu0 %v276
    %340 = vmatpush1.bf16.msra.mxu0 %v275
    %341 = vmatprep.subr.bf16.mxu0 %v278
    %342 = vmatpush1.bf16.msra.mxu0 %v277
    %343 = vmatprep.subr.bf16.mxu0 %v280
    %344 = vmatpush1.bf16.msra.mxu0 %v279
    %345 = vmatprep.subr.bf16.mxu0 %v282
    %346 = vmatpush1.bf16.msra.mxu0 %v281
    %347 = vmatprep.subr.bf16.mxu0 %v284
    %348 = vmatpush1.bf16.msra.mxu0 %v283
    %349 = vmatprep.subr.bf16.mxu0 %v286
    %350 = vmatpush1.bf16.msra.mxu0 %v285
    %351 = vmatprep.subr.bf16.mxu0 %v288
    %352 = vmatpush1.bf16.msra.mxu0 %v287
    %353 = vmatprep.subr.bf16.mxu0 %v290
    %354 = vmatpush1.bf16.msra.mxu0 %v289
    %355 = vmatprep.subr.bf16.mxu0 %v292
    %356 = vmatpush1.bf16.msra.mxu0 %v291
    %357 = vmatprep.subr.bf16.mxu0 %v294
    %358 = vmatpush1.bf16.msra.mxu0 %v293
    %359 = vmatprep.mubr.bf16.mxu0 %v122
    %360 = vmatmul.mubr.bf16.gmra.mrb[0].mxu0 %v121
    %v361 = vpop.f32.mrb[0].mxu0
    %v362 = vadd.f32 %v160, %v361
    %v363 = vpop.f32.mrb[0].mxu0
    %v364 = vadd.f32 %v164, %v363
    %v365 = vpop.f32.mrb[0].mxu0
    %v366 = vpop.f32.mrb[0].mxu0
    %367 = vdwg.mxu0
    %v368 = vmax.f32 %v362, 0.0
    %v369 = vmax.f32 %v364, 0.0
    %v370 = vpack.c.bf16 %v368, %v368
    %v371 = vpack.c.bf16 %v369, %v369
    %v372 = vld [vmem:[%s5] sm:$0xf]
    %v373 = vld [vmem:[%s5 + $0x4] sm:$0xf]
    %v374 = vld [vmem:[%s5 + $0x8] sm:$0xf]
    %v375 = vld [vmem:[%s5 + $0xc] sm:$0xf]
    %v376 = vld [vmem:[%s5 + $0x10] sm:$0xf]
    %v377 = vld [vmem:[%s5 + $0x14] sm:$0xf]
    %v378 = vld [vmem:[%s5 + $0x18] sm:$0xf]
    %v379 = vld [vmem:[%s5 + $0x1c] sm:$0xf]
    %v380 = vld [vmem:[%s5 + $0x20] sm:$0xf]
    %v381 = vld [vmem:[%s5 + $0x24] sm:$0xf]
    %v382 = vld [vmem:[%s5 + $0x28] sm:$0xf]
    %v383 = vld [vmem:[%s5 + $0x2c] sm:$0xf]
    %v384 = vld [vmem:[%s5 + $0x30] sm:$0xf]
    %v385 = vld [vmem:[%s5 + $0x34] sm:$0xf]
    %v386 = vld [vmem:[%s5 + $0x38] sm:$0xf]
    %v387 = vld [vmem:[%s5 + $0x3c] sm:$0xf]
    %v388 = vld [vmem:[%s5 + $0x40] sm:$0xf]
    %v389 = vld [vmem:[%s5 + $0x44] sm:$0xf]
    %v390 = vld [vmem:[%s5 + $0x48] sm:$0xf]
    %v391 = vld [vmem:[%s5 + $0x4c] sm:$0xf]
    %v392 = vld [vmem:[%s5 + $0x50] sm:$0xf]
    %v393 = vld [vmem:[%s5 + $0x54] sm:$0xf]
    %v394 = vld [vmem:[%s5 + $0x58] sm:$0xf]
    %v395 = vld [vmem:[%s5 + $0x5c] sm:$0xf]
    %v396 = vld [vmem:[%s5 + $0x60] sm:$0xf]
    %v397 = vld [vmem:[%s5 + $0x64] sm:$0xf]
    %v398 = vld [vmem:[%s5 + $0x68] sm:$0xf]
    %v399 = vld [vmem:[%s5 + $0x6c] sm:$0xf]
    %v400 = vld [vmem:[%s5 + $0x70] sm:$0xf]
    %v401 = vld [vmem:[%s5 + $0x74] sm:$0xf]
    %v402 = vld [vmem:[%s5 + $0x78] sm:$0xf]
    %v403 = vld [vmem:[%s5 + $0x7c] sm:$0xf]
    %v404 = vld [vmem:[%s6] sm:$0x1]
    %v406 = vlaneseq
    %v407 = vshrl.u32 %v406, 7
    %v408 = vsub.s32 0, %v407
    %v409 = vrot.slane %v404, %v408
    %v443 = vunpack.c.l.b16 %v372
    %v444 = vunpack.c.l.b16 %v373
    %v445 = vunpack.c.l.b16 %v374
    %v446 = vunpack.c.l.b16 %v375
    %v447 = vunpack.c.l.b16 %v376
    %v448 = vunpack.c.l.b16 %v377
    %v449 = vunpack.c.l.b16 %v378
    %v450 = vunpack.c.l.b16 %v379
    %v451 = vunpack.c.l.b16 %v380
    %v452 = vunpack.c.l.b16 %v381
    %v453 = vunpack.c.l.b16 %v382
    %v454 = vunpack.c.l.b16 %v383
    %v455 = vunpack.c.l.b16 %v384
    %v456 = vunpack.c.l.b16 %v385
    %v457 = vunpack.c.l.b16 %v386
    %v458 = vunpack.c.l.b16 %v387
    %v459 = vunpack.c.l.b16 %v388
    %v460 = vunpack.c.l.b16 %v389
    %v461 = vunpack.c.l.b16 %v390
    %v462 = vunpack.c.l.b16 %v391
    %v463 = vunpack.c.l.b16 %v392
    %v464 = vunpack.c.l.b16 %v393
    %v465 = vunpack.c.l.b16 %v394
    %v466 = vunpack.c.l.b16 %v395
    %v467 = vunpack.c.l.b16 %v396
    %v468 = vunpack.c.l.b16 %v397
    %v469 = vunpack.c.l.b16 %v398
    %v470 = vunpack.c.l.b16 %v399
    %v471 = vunpack.c.l.b16 %v400
    %v472 = vunpack.c.l.b16 %v401
    %v473 = vunpack.c.l.b16 %v402
    %v474 = vunpack.c.l.b16 %v403
    %v475 = vpack.c.b16 %v444, %v443
    %v476 = vpack.c.b16 %v446, %v445
    %v477 = vpack.c.b16 %v448, %v447
    %v478 = vpack.c.b16 %v450, %v449
    %v479 = vpack.c.b16 %v452, %v451
    %v480 = vpack.c.b16 %v454, %v453
    %v481 = vpack.c.b16 %v456, %v455
    %v482 = vpack.c.b16 %v458, %v457
    %v483 = vpack.c.b16 %v460, %v459
    %v484 = vpack.c.b16 %v462, %v461
    %v485 = vpack.c.b16 %v464, %v463
    %v486 = vpack.c.b16 %v466, %v465
    %v487 = vpack.c.b16 %v468, %v467
    %v488 = vpack.c.b16 %v470, %v469
    %v489 = vpack.c.b16 %v472, %v471
    %v490 = vpack.c.b16 %v474, %v473
    %507 = vmatprep.subr.bf16.mxu0 0
    %508 = vmatpush1.bf16.msra.mxu0 %v475
    %509 = vmatprep.subr.bf16.mxu0 0
    %510 = vmatpush1.bf16.msra.mxu0 %v476
    %511 = vmatprep.subr.bf16.mxu0 0
    %512 = vmatpush1.bf16.msra.mxu0 %v477
    %513 = vmatprep.subr.bf16.mxu0 0
    %514 = vmatpush1.bf16.msra.mxu0 %v478
    %515 = vmatprep.subr.bf16.mxu0 0
    %516 = vmatpush1.bf16.msra.mxu0 %v479
    %517 = vmatprep.subr.bf16.mxu0 0
    %518 = vmatpush1.bf16.msra.mxu0 %v480
    %519 = vmatprep.subr.bf16.mxu0 0
    %520 = vmatpush1.bf16.msra.mxu0 %v481
    %521 = vmatprep.subr.bf16.mxu0 0
    %522 = vmatpush1.bf16.msra.mxu0 %v482
    %523 = vmatprep.subr.bf16.mxu0 0
    %524 = vmatpush1.bf16.msra.mxu0 %v483
    %525 = vmatprep.subr.bf16.mxu0 0
    %526 = vmatpush1.bf16.msra.mxu0 %v484
    %527 = vmatprep.subr.bf16.mxu0 0
    %528 = vmatpush1.bf16.msra.mxu0 %v485
    %529 = vmatprep.subr.bf16.mxu0 0
    %530 = vmatpush1.bf16.msra.mxu0 %v486
    %531 = vmatprep.subr.bf16.mxu0 0
    %532 = vmatpush1.bf16.msra.mxu0 %v487
    %533 = vmatprep.subr.bf16.mxu0 0
    %534 = vmatpush1.bf16.msra.mxu0 %v488
    %535 = vmatprep.subr.bf16.mxu0 0
    %536 = vmatpush1.bf16.msra.mxu0 %v489
    %537 = vmatprep.subr.bf16.mxu0 0
    %538 = vmatpush1.bf16.msra.mxu0 %v490
    %539 = vmatprep.mubr.bf16.mxu0 %v371
    %540 = vmatmul.mubr.bf16.gmra.mrb[0].mxu0 %v370
    %v541 = vpop.f32.mrb[0].mxu0
    %v542 = vadd.f32 %v409, %v541
    %v543 = vpop.f32.mrb[0].mxu0
    %v544 = vpop.f32.mrb[0].mxu0
    %v545 = vpop.f32.mrb[0].mxu0
    %546 = vdwg.mxu0
    %v547 = vtanh.pop %v542
    %v548 = vld [vmem:[%s7] sm:$0x1]
    %v550 = vlaneseq
    %v551 = vshrl.u32 %v550, 7
    %v552 = vsub.s32 0, %v551
    %v553 = vrot.slane %v548, %v552
    %v555 = vmul.f32 %v547, %v553
    %v556 = vld [vmem:[%s8] sm:$0x1]
    %v558 = vlaneseq
    %v559 = vshrl.u32 %v558, 7
    %v560 = vsub.s32 0, %v559
    %v561 = vrot.slane %v556, %v560
    %v563 = vadd.f32 %v555, %v561
    %vm564 = vcmask 31744
    %565 = vst.msk [vmem:[%s9] sm:$0xff] %vm564, %v563
    // Predicated region
    $region42: #{policy_mlp_forward.1} parent=1 // pred_check
      _
    $region43: #{policy_mlp_forward.1} parent=1 // pred_check_branch
      %567 = sbr.rel (0) target = $region45
    $region44: #{policy_mlp_forward.1} parent=1 // pred_region
      _
    $region45: #{policy_mlp_forward.1} parent=1 // pred_fallthru
      _
    // Predicated region
    $region46: #{policy_mlp_forward.1} parent=1 // pred_check
      _
    $region47: #{policy_mlp_forward.1} parent=1 // pred_check_branch
      %569 = sbr.rel (0) target = $region49
    $region48: #{policy_mlp_forward.1} parent=1 // pred_region
      _
    $region49: #{policy_mlp_forward.1} parent=1 // pred_fallthru
      _
    %570 = vsyncpa [#allocation3], 1

</llo_original>
